<compile_context>
chip_gen: v7x
topology: tpu7x:2x2x1
jax: 0.10.0
libtpu: 0.0.40
codegen_flags: <defaults>
</compile_context>

<pallas_src>
import jax
import jax.numpy as jnp
from jax.experimental import pallas as pl
from jax.experimental.pallas import tpu as pltpu


_LANES = 128
_TM_CAP = 8192                  # max rows per tile
_TARGET_TILE_BYTES = 2 << 20    # ~2 MiB nominal input tile (double-buffered by Pallas)


def _round_up(x, m):
    return (x + m - 1) // m * m


def _choose_row_tile(n_rows, d, itemsize):
    """Rows per tile: a single lane-aligned tile for small inputs, else a
    128-multiple sized so the input tile is ~_TARGET_TILE_BYTES (capped)."""
    target = (_TARGET_TILE_BYTES // max(1, d * itemsize)) // _LANES * _LANES
    target = max(_LANES, min(_TM_CAP, target))
    n_rows_pad = _round_up(n_rows, _LANES)
    return n_rows_pad if n_rows_pad <= target else target


def _att_prob_kernel(x_ref, w_ref, b_ref, o_ref):
    # x_ref: (TM, D)  VMEM row tile of the flattened features (the hot HBM stream)
    # w_ref: (1, D)   VMEM, constant index_map -> resident, no re-DMA per step
    # b_ref: (1,)     SMEM scalar bias
    # o_ref: (1, TM)  VMEM, lane-dense output slab (TM is a multiple of 128)
    logits = jax.lax.dot_general(
        w_ref[...], x_ref[...],
        dimension_numbers=(((1,), (1,)), ((), ())),     # contract the feature dim
        preferred_element_type=jnp.float32,
    )                                                   # (1, TM) f32, lane-dense
    probs = jax.nn.sigmoid(logits + b_ref[0])           # EUP sigmoid + VPU add
    o_ref[...] = probs.astype(o_ref.dtype)


@jax.jit
def att_probability(x, weight, bias):
    """AttProbability forward: sigmoid(Linear(D, 1)(x)).squeeze(-1).

    x: [B, M, D], weight: [1, D], bias: [1]  ->  probs: [B, M]
    """
    B, M, D = x.shape
    n = B * M
    itemsize = jnp.dtype(x.dtype).itemsize

    tm = _choose_row_tile(n, D, itemsize)
    n_pad = _round_up(n, tm)
    num_tiles = n_pad // tm

    x_flat = x.reshape(n, D)
    if n_pad != n:
        x_flat = jnp.pad(x_flat, ((0, n_pad - n), (0, 0)))

    w2d = weight.reshape(1, D).astype(x.dtype)
    b1d = bias.reshape(1).astype(jnp.float32)

    out = pl.pallas_call(
        _att_prob_kernel,
        out_shape=jax.ShapeDtypeStruct((num_tiles, tm), x.dtype),
        grid_spec=pltpu.PrefetchScalarGridSpec(
            num_scalar_prefetch=0,
            grid=(num_tiles,),
            in_specs=[
                # Large row tiles of the flattened features.
                pl.BlockSpec((tm, D), lambda i: (i, 0)),
                # Single weight row, kept resident in VMEM across all grid steps.
                pl.BlockSpec((1, D), lambda i: (0, 0)),
                # Scalar bias in SMEM (no per-step VMEM load / vreg broadcast).
                pl.BlockSpec(memory_space=pltpu.MemorySpace.SMEM),
            ],
            out_specs=pl.BlockSpec((1, tm), lambda i: (i, 0)),
        ),
        compiler_params=pltpu.CompilerParams(
            # Row tiles are independent -> v7x's two TensorCores can split them.
            dimension_semantics=("parallel",),
            # Explicit scoped-VMEM budget; tile sizing keeps double-buffered
            # tiles well under this on v5e/v6e/v7x.
            vmem_limit_bytes=32 * 1024 * 1024,
        ),
    )(x_flat, w2d, b1d)

    # Drop row padding and restore the (B, M) shape (squeeze(-1) of the module).
    return out.reshape(n_pad)[:n].reshape(B, M)


if __name__ == "__main__":
    # Small shapes consistent with the module: batch=2, n_primitives=8, feature dim=32.
    B, M, D = 2, 8, 32
    key = jax.random.PRNGKey(0)
    kx, kw, kb = jax.random.split(key, 3)

    x = jax.random.normal(kx, (B, M, D), dtype=jnp.float32)

    # Deterministic parameter init matching nn.Linear(D, 1):
    # uniform(-1/sqrt(D), 1/sqrt(D)) for both weight and bias.
    bound = 1.0 / (D ** 0.5)
    weight = jax.random.uniform(kw, (1, D), minval=-bound, maxval=bound, dtype=jnp.float32)
    bias = jax.random.uniform(kb, (1,), minval=-bound, maxval=bound, dtype=jnp.float32)

    probs = jax.block_until_ready(att_probability(x, weight, bias))

    # Pure-JAX reference for correctness.
    ref = jax.nn.sigmoid(jnp.einsum("bmd,d->bm", x, weight[0]) + bias[0])
    assert probs.shape == (B, M)
    assert jnp.allclose(probs, ref, atol=1e-5, rtol=1e-5), "mismatch vs reference"

    print("KERNEL_OK")
</pallas_src>

<mosaic_0001>
module attributes {stable_mosaic.version = 11 : i64} {
  func.func @_att_prob_kernel(%arg0: i32, %arg1: memref<128x32xf32, #tpu.memory_space<vmem>>, %arg2: memref<1x32xf32, #tpu.memory_space<vmem>>, %arg3: memref<1xf32, #tpu.memory_space<smem>>, %arg4: memref<1x128xf32, #tpu.memory_space<vmem>>) attributes {dimension_semantics = [#tpu.dimension_semantics<parallel>], iteration_bounds = array<i64: 1>, scalar_prefetch = 0 : i64, scratch_operands = 0 : i64, tpu.core_type = #tpu.core_type<tc>, window_params = [{transform_indices = @transform_0, window_bounds = array<i64: 128, 32>}, {pipeline_mode = #tpu.pipeline_mode<synchronous>, transform_indices = @transform_1, window_bounds = array<i64: 1, 32>}, {transform_indices = @transform_2, window_bounds = array<i64: 1>}, {transform_indices = @transform_3, window_bounds = array<i64: 1, 128>}]} {
    %c0 = arith.constant 0 : index
    %c0_0 = arith.constant 0 : index
    %0 = vector.load %arg2[%c0, %c0_0] : memref<1x32xf32, #tpu.memory_space<vmem>>, vector<1x32xf32>
    %c0_1 = arith.constant 0 : index
    %c0_2 = arith.constant 0 : index
    %1 = vector.load %arg1[%c0_1, %c0_2] : memref<128x32xf32, #tpu.memory_space<vmem>>, vector<128x32xf32>
    %cst = arith.constant dense<0.000000e+00> : vector<1x128xf32>
    %2 = tpu.matmul %0, %1, %cst {dimension_numbers = #tpu.dot_dimension_numbers<[1], [1], [0], [0], [0, 0, 1, 0], [], []>} : vector<1x32xf32>, vector<128x32xf32>, vector<1x128xf32> -> vector<1x128xf32>
    %c0_3 = arith.constant 0 : index
    %3 = memref.load %arg3[%c0_3] : memref<1xf32, #tpu.memory_space<smem>>
    %4 = vector.broadcast %3 : f32 to vector<1x128xf32>
    %5 = arith.addf %2, %4 : vector<1x128xf32>
    %6 = arith.negf %5 : vector<1x128xf32>
    %7 = math.exp %6 : vector<1x128xf32>
    %cst_4 = arith.constant 1.000000e+00 : f32
    %8 = vector.broadcast %cst_4 : f32 to vector<1x128xf32>
    %9 = arith.addf %8, %7 : vector<1x128xf32>
    %10 = arith.divf %8, %9 : vector<1x128xf32>
    %c0_5 = arith.constant 0 : index
    %c0_6 = arith.constant 0 : index
    %11 = vector.load %arg4[%c0_5, %c0_6] : memref<1x128xf32, #tpu.memory_space<vmem>>, vector<1x128xf32>
    tpu.vector_store %arg4[%c0_5, %c0_6], %10 {strides = array<i32>} : memref<1x128xf32, #tpu.memory_space<vmem>>, vector<1x128xf32>,
    return
  }
  func.func @transform_0(%arg0: i32) -> (i32, i32) {
    %c0_i32 = arith.constant 0 : i32
    %c0_i32_0 = arith.constant 0 : i32
    return %arg0, %c0_i32 : i32, i32
  }
  func.func @transform_1(%arg0: i32) -> (i32, i32) {
    %c0_i32 = arith.constant 0 : i32
    %c0_i32_0 = arith.constant 0 : i32
    %c0_i32_1 = arith.constant 0 : i32
    return %c0_i32, %c0_i32_0 : i32, i32
  }
  func.func @transform_2(%arg0: i32) -> i32 {
    %c0_i32 = arith.constant 0 : i32
    %c0_i32_0 = arith.constant 0 : i32
    return %c0_i32 : i32
  }
  func.func @transform_3(%arg0: i32) -> (i32, i32) {
    %c0_i32 = arith.constant 0 : i32
    %c0_i32_0 = arith.constant 0 : i32
    return %arg0, %c0_i32 : i32, i32
  }
}

</mosaic_0001>

<llo_original>
// kernel: att_probability.1
$region0: #{att_probability.1}
  #allocation0 [shape = 'u32[]', space=smem, size = 0x4, offset = 0x4, fixed_abs, tag = 'smem constant byte address 0x4 - core index']
  #allocation1 [shape = 'u32[144,128]{1,0:T(1,128)}', space=vmem, size = 0x12000, scoped, tag = 'internal scratch']
  #allocation2 [shape = 'f32[1]{0:T(128)S(6)}', space=smem, size = 0x200, scoped, tag = 'scoped memory for att_probability.1']
  %s0 = inlined_call_operand.vmem [shape: f32[128,32], index: 0, kind: input, shape index: {}]
  %s1 = inlined_call_operand.vmem [shape: f32[1,32], index: 1, kind: input, shape index: {}]
  %s2 = inlined_call_operand.<no memory space> [shape: f32[1], index: 2, kind: input, shape index: {}]
  %s3 = inlined_call_operand.vmem [shape: f32[1,128], index: 3, kind: output, shape index: {}]
  %s4 = sld [smem:[#allocation0]]
  $region22: #{att_probability.1} parent=0
    _
  %s6 = ssub.s32 1, %s4
  %s7 = scalar_select 0, %s6, %s4
  %8 = sst [smem:[#allocation2]] %s2
  // Predicated region
  $region2: #{att_probability.1} parent=0 // pred_check
    _
  $region3: #{att_probability.1} parent=0 // pred_check_branch
    %10 = sbr.rel (0) target = $region5
  $region4: #{att_probability.1} parent=0 // pred_region
    _
  $region5: #{att_probability.1} parent=0 // pred_fallthru
    _
  // Predicated region
  $region6: #{att_probability.1} parent=0 // pred_check
    _
  $region7: #{att_probability.1} parent=0 // pred_check_branch
    %12 = sbr.rel (0) target = $region9
  $region8: #{att_probability.1} parent=0 // pred_region
    _
  $region9: #{att_probability.1} parent=0 // pred_fallthru
    _
  // Predicated region
  $region10: #{att_probability.1} parent=0 // pred_check
    _
  $region11: #{att_probability.1} parent=0 // pred_check_branch
    %14 = sbr.rel (0) target = $region13
  $region12: #{att_probability.1} parent=0 // pred_region
    _
  $region13: #{att_probability.1} parent=0 // pred_fallthru
    _
  %v15 = vld [vmem:[%s1] sm:$0x1]
  %v16 = vld [vmem:[%s0] sm:$0xff]
  %v17 = vld [vmem:[%s0 + $0x8] sm:$0xff]
  %v18 = vld [vmem:[%s0 + $0x10] sm:$0xff]
  %v19 = vld [vmem:[%s0 + $0x18] sm:$0xff]
  %v20 = vld [vmem:[%s0 + $0x20] sm:$0xff]
  %v21 = vld [vmem:[%s0 + $0x28] sm:$0xff]
  %v22 = vld [vmem:[%s0 + $0x30] sm:$0xff]
  %v23 = vld [vmem:[%s0 + $0x38] sm:$0xff]
  %v24 = vld [vmem:[%s0 + $0x40] sm:$0xff]
  %v25 = vld [vmem:[%s0 + $0x48] sm:$0xff]
  %v26 = vld [vmem:[%s0 + $0x50] sm:$0xff]
  %v27 = vld [vmem:[%s0 + $0x58] sm:$0xff]
  %v28 = vld [vmem:[%s0 + $0x60] sm:$0xff]
  %v29 = vld [vmem:[%s0 + $0x68] sm:$0xff]
  %v30 = vld [vmem:[%s0 + $0x70] sm:$0xff]
  %v31 = vld [vmem:[%s0 + $0x78] sm:$0xff]
  %s32 = sld [smem:[#allocation2]]
  %v33 = vstv %s32
  %vm34 = vcmask 261120
  %v36 = vsel %vm34, %v15, 0
  %v39 = vsel %vm34, %v16, 0
  %v42 = vsel %vm34, %v17, 0
  %v45 = vsel %vm34, %v18, 0
  %v48 = vsel %vm34, %v19, 0
  %v51 = vsel %vm34, %v20, 0
  %v54 = vsel %vm34, %v21, 0
  %v57 = vsel %vm34, %v22, 0
  %v60 = vsel %vm34, %v23, 0
  %v63 = vsel %vm34, %v24, 0
  %v66 = vsel %vm34, %v25, 0
  %v69 = vsel %vm34, %v26, 0
  %v72 = vsel %vm34, %v27, 0
  %v75 = vsel %vm34, %v28, 0
  %v78 = vsel %vm34, %v29, 0
  %v81 = vsel %vm34, %v30, 0
  %v84 = vsel %vm34, %v31, 0
  %86 = vmatprep.subr.mxu0 0.0
  %87 = vmatpush1.xpose.msra.mxu0 %v39
  %88 = vmatprep.subr.mxu0 0.0
  %89 = vmatpush1.xpose.msra.mxu0 %v42
  %90 = vmatprep.subr.mxu0 0.0
  %91 = vmatpush1.xpose.msra.mxu0 %v45
  %92 = vmatprep.subr.mxu0 0.0
  %93 = vmatpush1.xpose.msra.mxu0 %v48
  %94 = vmatprep.subr.mxu0 0.0
  %95 = vmatpush1.xpose.msra.mxu0 %v51
  %96 = vmatprep.subr.mxu0 0.0
  %97 = vmatpush1.xpose.msra.mxu0 %v54
  %98 = vmatprep.subr.mxu0 0.0
  %99 = vmatpush1.xpose.msra.mxu0 %v57
  %100 = vmatprep.subr.mxu0 0.0
  %101 = vmatpush1.xpose.msra.mxu0 %v60
  %102 = vmatprep.subr.mxu0 0.0
  %103 = vmatpush1.xpose.msra.mxu0 %v63
  %104 = vmatprep.subr.mxu0 0.0
  %105 = vmatpush1.xpose.msra.mxu0 %v66
  %106 = vmatprep.subr.mxu0 0.0
  %107 = vmatpush1.xpose.msra.mxu0 %v69
  %108 = vmatprep.subr.mxu0 0.0
  %109 = vmatpush1.xpose.msra.mxu0 %v72
  %110 = vmatprep.subr.mxu0 0.0
  %111 = vmatpush1.xpose.msra.mxu0 %v75
  %112 = vmatprep.subr.mxu0 0.0
  %113 = vmatpush1.xpose.msra.mxu0 %v78
  %114 = vmatprep.subr.mxu0 0.0
  %115 = vmatpush1.xpose.msra.mxu0 %v81
  %116 = vmatprep.subr.mxu0 0.0
  %117 = vmatpush1.xpose.msra.mxu0 %v84
  %118 = vmatprep.subr.mxu0 0.0
  %119 = vmatpush1.xpose.msra.mxu0 0.0
  %120 = vmatprep.subr.mxu0 0.0
  %121 = vmatpush1.xpose.msra.mxu0 0.0
  %122 = vmatprep.subr.mxu0 0.0
  %123 = vmatpush1.xpose.msra.mxu0 0.0
  %124 = vmatprep.subr.mxu0 0.0
  %125 = vmatpush1.xpose.msra.mxu0 0.0
  %126 = vmatprep.subr.mxu0 0.0
  %127 = vmatpush1.xpose.msra.mxu0 0.0
  %128 = vmatprep.subr.mxu0 0.0
  %129 = vmatpush1.xpose.msra.mxu0 0.0
  %130 = vmatprep.subr.mxu0 0.0
  %131 = vmatpush1.xpose.msra.mxu0 0.0
  %132 = vmatprep.subr.mxu0 0.0
  %133 = vmatpush1.xpose.msra.mxu0 0.0
  %134 = vmatprep.subr.mxu0 0.0
  %135 = vmatpush1.xpose.msra.mxu0 0.0
  %136 = vmatprep.subr.mxu0 0.0
  %137 = vmatpush1.xpose.msra.mxu0 0.0
  %138 = vmatprep.subr.mxu0 0.0
  %139 = vmatpush1.xpose.msra.mxu0 0.0
  %140 = vmatprep.subr.mxu0 0.0
  %141 = vmatpush1.xpose.msra.mxu0 0.0
  %142 = vmatprep.subr.mxu0 0.0
  %143 = vmatpush1.xpose.msra.mxu0 0.0
  %144 = vmatprep.subr.mxu0 0.0
  %145 = vmatpush1.xpose.msra.mxu0 0.0
  %146 = vmatprep.subr.mxu0 0.0
  %147 = vmatpush1.xpose.msra.mxu0 0.0
  %148 = vmatprep.subr.mxu0 0.0
  %149 = vmatpush1.xpose.msra.mxu0 0.0
  %150 = vmatprep.mubr.f32.mxu0 0.0
  %151 = vmatmul.mubr.f32.gmra.mrb[0].mxu0 %v36
  %v152 = vpop.f32.mrb[0].mxu0
  %v153 = vadd.f32 %v33, %v152
  %v154 = vpop.f32.mrb[0].mxu0
  %155 = vdwg.mxu0
  %v156 = vxor.u32 %v153, 2147483648
  %v157 = vmul.f32 %v156, 1.442695
  %v158 = vpow.pop %v157
  %v159 = vadd.f32 %v158, 1.0
  %v160 = vrcp.pop %v159
  %v161 = vmul.f32 1.0, %v160
  %162 = vst [vmem:[%s3] sm:$0x1] %v161
  // Predicated region
  $region14: #{att_probability.1} parent=0 // pred_check
    _
  $region15: #{att_probability.1} parent=0 // pred_check_branch
    %164 = sbr.rel (0) target = $region17
  $region16: #{att_probability.1} parent=0 // pred_region
    _
  $region17: #{att_probability.1} parent=0 // pred_fallthru
    _
  // Predicated region
  $region18: #{att_probability.1} parent=0 // pred_check
    _
  $region19: #{att_probability.1} parent=0 // pred_check_branch
    %166 = sbr.rel (0) target = $region21
  $region20: #{att_probability.1} parent=0 // pred_region
    _
  $region21: #{att_probability.1} parent=0 // pred_fallthru
    _

</llo_original>
